<compile_context>
chip_gen: v7x
topology: tpu7x:2x2x1
jax: 0.10.0
libtpu: 0.0.40
codegen_flags: <defaults>
</compile_context>

<pallas_src>
import functools

import jax
import jax.numpy as jnp
from jax import lax
from jax.experimental import pallas as pl
from jax.experimental.pallas import tpu as pltpu


# ----------------------------------------------------------------------------
# Generation-aware VMEM budgets
# ----------------------------------------------------------------------------
def _hw_budgets():
    """Returns (vmem_limit_bytes, target_block_bytes) for the current TPU gen."""
    try:
        cap = int(pltpu.get_tpu_info().vmem_capacity_bytes)
    except Exception:
        cap = 128 * 1024 * 1024
    vmem_limit = min(cap // 2, 64 * 1024 * 1024)   # 64 MiB on v5e/v6e, 32 MiB on v7x
    target_block = max(1 << 20, vmem_limit // 16)  # ~4 MiB / ~2 MiB activation blocks
    return vmem_limit, target_block


def _pick_pix_tile(npix, cin, cout, itemsize, target_block_bytes):
    denom = max(1, (cin + cout) * itemsize)
    t = max(128, (target_block_bytes // denom) // 128 * 128)
    return npix if npix <= t else t


# ----------------------------------------------------------------------------
# Kernel 1: block1  (bn1 -> relu -> 1x1 stride-s conv + bias -> bn2 -> relu)
# ----------------------------------------------------------------------------
def _block1_kernel(x_ref, w_ref, ps_ref, pb_ref, qs_ref, qb_ref, o_ref):
    # x: (1, Cin, TP)   w: (C4, Cin)   ps/pb: (Cin, 1)   qs/qb: (C4, 1)
    x = x_ref[0]                                            # (Cin, TP)
    xa = jnp.maximum(x * ps_ref[...] + pb_ref[...], 0.0)    # bn1 + relu (f32)
    y = jnp.dot(w_ref[...], xa, preferred_element_type=jnp.float32)   # (C4, TP)
    y = jnp.maximum(y * qs_ref[...] + qb_ref[...], 0.0)     # (bias∘bn2) + relu
    o_ref[...] = y.reshape(o_ref.shape).astype(o_ref.dtype)


def _block1(x3, w, ps, pb, qs, qb, *, vmem_limit, target_bytes):
    B, Cin, Np = x3.shape
    C4 = w.shape[0]
    tp = _pick_pix_tile(Np, Cin, C4, x3.dtype.itemsize, target_bytes)
    return pl.pallas_call(
        _block1_kernel,
        grid=(B, pl.cdiv(Np, tp)),
        in_specs=[
            pl.BlockSpec((1, Cin, tp), lambda b, t: (b, 0, t)),
            pl.BlockSpec((C4, Cin), lambda b, t: (0, 0)),
            pl.BlockSpec((Cin, 1), lambda b, t: (0, 0)),
            pl.BlockSpec((Cin, 1), lambda b, t: (0, 0)),
            pl.BlockSpec((C4, 1), lambda b, t: (0, 0)),
            pl.BlockSpec((C4, 1), lambda b, t: (0, 0)),
        ],
        out_specs=pl.BlockSpec((1, C4, tp), lambda b, t: (b, 0, t)),
        out_shape=jax.ShapeDtypeStruct((B, C4, Np), x3.dtype),
        compiler_params=pltpu.CompilerParams(
            dimension_semantics=("parallel", "parallel"),
            vmem_limit_bytes=vmem_limit),
    )(x3, w, ps, pb, qs, qb)


# ----------------------------------------------------------------------------
# Kernel 2: block2 (3x3 conv + bias) -> bn3 -> relu -> block3 (1x1 conv + bias)
#           -> ChannelAttention -> degenerate SpatialAttention, fused per batch.
# ----------------------------------------------------------------------------
def _block23_attn_kernel(saw_ref, a2_ref, wm_ref, w2_ref, p2s_ref, p2t_ref,
                         w3_ref, b3_ref, w1_ref, wfc2_ref,
                         sa_ref, pad_ref, *, ws, guard, inv_np, inv_c):
    # a2: (1, C4, Np) flattened row-major (Hs, Ws)     wm: (2, Np) column masks
    # w2: (9, C4, C4) per-tap 3x3 weights              p2s/p2t: (C4, 1)
    # w3: (Cout, C4)  b3: (Cout, 1)  w1: (Cr, Cout)  wfc2: (Cout, Cr)
    # saw: (2,) SMEM center taps of the 7x7 spatial-attention conv
    # pad_ref: (C4, Np + 2*guard) VMEM staging buffer (guards = zero padding)
    c4 = a2_ref.shape[1]
    npix = a2_ref.shape[2]

    # Stage this batch element into the zero-guarded flat buffer.  The guard
    # zeros provide the vertical zero padding of the 3x3 conv; the horizontal
    # row-wrap is killed by the precomputed column masks.
    pad_ref[...] = jnp.zeros(pad_ref.shape, jnp.float32)
    pad_ref[:, guard:guard + npix] = a2_ref[0].astype(jnp.float32)

    wm_left = wm_ref[0:1, :]      # valid where w-1 >= 0
    wm_right = wm_ref[1:2, :]     # valid where w+1 <  Ws

    acc = jnp.zeros((c4, npix), jnp.float32)
    for t in range(9):
        ky, kx = t // 3, t % 3
        dy, dx = ky - 1, kx - 1
        off = guard + dy * ws + dx
        tap = pad_ref[:, off:off + npix]                  # shifted window
        if dx == -1:
            tap = tap * wm_left
        elif dx == 1:
            tap = tap * wm_right
        acc = acc + jnp.dot(w2_ref[t], tap, preferred_element_type=jnp.float32)

    # (bias_b2 ∘ bn3) + relu, then block3's 1x1 conv + bias  (never leaves VMEM)
    a3 = jnp.maximum(acc * p2s_ref[...] + p2t_ref[...], 0.0)            # (C4, Np)
    out3 = jnp.dot(w3_ref[...], a3, preferred_element_type=jnp.float32)
    out3 = out3 + b3_ref[...]                                           # (Cout, Np)

    # ChannelAttention: global avg/max pool + shared MLP (fc2 is linear, so the
    # two branches are summed before fc2) + sigmoid.
    avg = jnp.sum(out3, axis=1, keepdims=True) * inv_np                 # (Cout, 1)
    mx = jnp.max(out3, axis=1, keepdims=True)                           # (Cout, 1)
    h_avg = jnp.maximum(
        jnp.dot(w1_ref[...], avg, preferred_element_type=jnp.float32), 0.0)
    h_max = jnp.maximum(
        jnp.dot(w1_ref[...], mx, preferred_element_type=jnp.float32), 0.0)
    logits = jnp.dot(wfc2_ref[...], h_avg + h_max,
                     preferred_element_type=jnp.float32)                # (Cout, 1)
    ca = 1.0 / (1.0 + jnp.exp(-logits))

    # SpatialAttention on a (C, 1, 1) map is degenerate: only the center taps
    # of the 7x7 conv see real data.
    ca_mean = jnp.sum(ca, axis=0, keepdims=True) * inv_c                # (1, 1)
    ca_max = jnp.max(ca, axis=0, keepdims=True)                         # (1, 1)
    sa_logit = saw_ref[0] * ca_mean + saw_ref[1] * ca_max
    sa = 1.0 / (1.0 + jnp.exp(-sa_logit))                               # (1, 1)
    sa_ref[...] = jnp.broadcast_to(sa.reshape(1, 1, 1), sa_ref.shape)


def _block23_attention(a2, hs, ws, w2_taps, p2s, p2t, w3, b3, w1fc, w2fc, sa_w,
                       *, vmem_limit):
    B, C4, Np = a2.shape
    Cout, Cr = w2fc.shape
    guard = ((ws + 1 + 127) // 128) * 128

    # Horizontal-tap validity masks (period-Ws pattern in the flat layout).
    col = jnp.arange(Np, dtype=jnp.int32) % ws
    wmask = jnp.stack([(col >= 1).astype(jnp.float32),
                       (col <= ws - 2).astype(jnp.float32)], axis=0)    # (2, Np)
    sa_center = jnp.stack([sa_w[0, 0, 3, 3], sa_w[0, 1, 3, 3]]).astype(jnp.float32)

    kernel = functools.partial(_block23_attn_kernel, ws=ws, guard=guard,
                               inv_np=1.0 / float(Np), inv_c=1.0 / float(Cout))
    sa = pl.pallas_call(
        kernel,
        grid=(B,),
        in_specs=[
            pl.BlockSpec(memory_space=pltpu.MemorySpace.SMEM),   # sa_center (2,)
            pl.BlockSpec((1, C4, Np), lambda b: (b, 0, 0)),      # a2, per batch
            pl.BlockSpec((2, Np), lambda b: (0, 0)),             # column masks
            pl.BlockSpec((9, C4, C4), lambda b: (0, 0, 0)),      # 3x3 tap weights
            pl.BlockSpec((C4, 1), lambda b: (0, 0)),             # bn3 scale
            pl.BlockSpec((C4, 1), lambda b: (0, 0)),             # bn3∘bias shift
            pl.BlockSpec((Cout, C4), lambda b: (0, 0)),          # block3 weight
            pl.BlockSpec((Cout, 1), lambda b: (0, 0)),           # block3 bias
            pl.BlockSpec((Cr, Cout), lambda b: (0, 0)),          # fc1
            pl.BlockSpec((Cout, Cr), lambda b: (0, 0)),          # fc2
        ],
        out_specs=pl.BlockSpec((1, 1, 128), lambda b: (b, 0, 0)),
        out_shape=jax.ShapeDtypeStruct((B, 1, 128), jnp.float32),
        scratch_shapes=[pltpu.VMEM((C4, Np + 2 * guard), jnp.float32)],
        compiler_params=pltpu.CompilerParams(
            dimension_semantics=("parallel",),
            vmem_limit_bytes=vmem_limit),
    )(sa_center, a2, wmask, w2_taps, p2s, p2t, w3, b3, w1fc, w2fc)
    return sa[:, 0, 0]                                           # (B,) f32


# ----------------------------------------------------------------------------
# Kernel 3: identity branch (1x1 stride-s conv + bias) with the per-batch
#           spatial-attention scalar fused in as the residual add.
# ----------------------------------------------------------------------------
def _conv1_res_kernel(sa_ref, x_ref, w_ref, b_ref, o_ref):
    # sa: (B,) SMEM f32   x: (1, Cin, TP)   w: (Cout, Cin)   b: (Cout, 1)
    b_idx = pl.program_id(0)
    y = jnp.dot(w_ref[...], x_ref[0], preferred_element_type=jnp.float32)
    y = y + (b_ref[...] + sa_ref[b_idx])                 # bias + sa in one add
    o_ref[...] = y.reshape(o_ref.shape).astype(o_ref.dtype)


def _conv1_residual(x3, w, bias, sa, *, vmem_limit, target_bytes):
    B, Cin, Np = x3.shape
    Cout = w.shape[0]
    tp = _pick_pix_tile(Np, Cin, Cout, x3.dtype.itemsize, target_bytes)
    return pl.pallas_call(
        _conv1_res_kernel,
        grid=(B, pl.cdiv(Np, tp)),
        in_specs=[
            pl.BlockSpec(memory_space=pltpu.MemorySpace.SMEM),   # sa (B,)
            pl.BlockSpec((1, Cin, tp), lambda b, t: (b, 0, t)),
            pl.BlockSpec((Cout, Cin), lambda b, t: (0, 0)),
            pl.BlockSpec((Cout, 1), lambda b, t: (0, 0)),
        ],
        out_specs=pl.BlockSpec((1, Cout, tp), lambda b, t: (b, 0, t)),
        out_shape=jax.ShapeDtypeStruct((B, Cout, Np), x3.dtype),
        compiler_params=pltpu.CompilerParams(
            dimension_semantics=("parallel", "parallel"),
            vmem_limit_bytes=vmem_limit),
    )(sa, x3, w, bias)


# ----------------------------------------------------------------------------
# Module wrapper (CBAMDownBottleneck.forward, inference-mode BN)
# ----------------------------------------------------------------------------
def _fold_bn(gamma, beta, mean, var, eps=1e-5):
    inv = 1.0 / jnp.sqrt(var.astype(jnp.float32) + eps)
    s = gamma.astype(jnp.float32) * inv
    t = beta.astype(jnp.float32) - mean.astype(jnp.float32) * s
    return s.reshape(-1, 1), t.reshape(-1, 1)


def cbam_down_bottleneck(x, params, *, stride=2):
    """x: (B, in_chans, H, W) NCHW.  Returns (B, out_chans, H//s, W//s)."""
    B, Cin, H, W = x.shape
    Cout = params["conv1_w"].shape[0]
    C4 = Cout // 4
    Cr = params["fc1_w"].shape[0]
    vmem_limit, target_bytes = _hw_budgets()

    # 1x1 stride-s conv == spatial subsample then channel matmul (the per-channel
    # bn/relu commute with the subsample).
    # TODO(synk): fold the stride-2 subsample into the kernels (strided reads)
    # to avoid materializing x_sub in HBM; it is the smallest tensor in play.
    x_sub = x[:, :, ::stride, ::stride]
    Hs, Ws = x_sub.shape[2], x_sub.shape[3]
    Np = Hs * Ws
    x3 = x_sub.reshape(B, Cin, Np)

    s1, t1 = _fold_bn(*params["bn1"])
    s2, t2 = _fold_bn(*params["bn2"])
    s3, t3 = _fold_bn(*params["bn3"])

    # block1 with block2's bn2+relu fused as the epilogue (conv bias folded in).
    q1s = s2
    q1b = s2 * params["b1_b"].astype(jnp.float32).reshape(-1, 1) + t2
    a2 = _block1(x3, params["b1_w"].reshape(C4, Cin), s1, t1, q1s, q1b,
                 vmem_limit=vmem_limit, target_bytes=target_bytes)

    # block2 (3x3, in-kernel taps) + bn3 + relu + block3 + channel/spatial
    # attention, fully fused; only the per-batch scalar sa is written to HBM.
    w2_taps = params["b2_w"].transpose(2, 3, 0, 1).reshape(9, C4, C4)
    p2s = s3
    p2t = s3 * params["b2_b"].astype(jnp.float32).reshape(-1, 1) + t3
    sa = _block23_attention(
        a2, Hs, Ws, w2_taps, p2s, p2t,
        params["b3_w"].reshape(Cout, C4),
        params["b3_b"].astype(jnp.float32).reshape(-1, 1),
        params["fc1_w"].reshape(Cr, Cout),
        params["fc2_w"].reshape(Cout, Cr),
        params["sa_w"],
        vmem_limit=vmem_limit)

    # identity branch with the broadcasted residual add fused.
    # TODO(synk): PyTorch's literal in-place `out += identity` is an invalid
    # in-place broadcast; we implement `spatial_attention + identity`.
    out = _conv1_residual(x3, params["conv1_w"].reshape(Cout, Cin),
                          params["conv1_b"].astype(jnp.float32).reshape(-1, 1),
                          sa, vmem_limit=vmem_limit, target_bytes=target_bytes)
    return out.reshape(B, Cout, Hs, Ws)


# ----------------------------------------------------------------------------
# Pure-JAX reference (mirrors the PyTorch forward, inference-mode BN)
# ----------------------------------------------------------------------------
def _reference(x, params, *, stride=2):
    hp = lax.Precision.HIGHEST

    def conv(a, w, b=None, stride=1, padding=0):
        out = lax.conv_general_dilated(
            a, w, (stride, stride), [(padding, padding)] * 2,
            dimension_numbers=("NCHW", "OIHW", "NCHW"), precision=hp)
        if b is not None:
            out = out + b.reshape(1, -1, 1, 1)
        return out

    def bn(a, g, be, m, v, eps=1e-5):
        g, be, m, v = (t.reshape(1, -1, 1, 1) for t in (g, be, m, v))
        return (a - m) / jnp.sqrt(v + eps) * g + be

    identity = conv(x, params["conv1_w"], params["conv1_b"], stride=stride)
    out = conv(jax.nn.relu(bn(x, *params["bn1"])), params["b1_w"],
               params["b1_b"], stride=stride)
    out = conv(jax.nn.relu(bn(out, *params["bn2"])), params["b2_w"],
               params["b2_b"], padding=1)
    out = conv(jax.nn.relu(bn(out, *params["bn3"])), params["b3_w"],
               params["b3_b"])

    avg = jnp.mean(out, axis=(2, 3), keepdims=True)
    mx = jnp.max(out, axis=(2, 3), keepdims=True)

    def mlp(t):
        return conv(jax.nn.relu(conv(t, params["fc1_w"])), params["fc2_w"])

    ca = jax.nn.sigmoid(mlp(avg) + mlp(mx))                       # (B, C, 1, 1)
    a = jnp.mean(ca, axis=1, keepdims=True)
    m = jnp.max(ca, axis=1, keepdims=True)
    sa = jax.nn.sigmoid(conv(jnp.concatenate([a, m], axis=1),
                             params["sa_w"], padding=3))          # (B, 1, 1, 1)
    return sa + identity


if __name__ == "__main__":
    B, Cin, H, W = 2, 16, 32, 32
    Cout, stride, ratio = 64, 2, 16
    C4, Cr = Cout // 4, Cout // ratio
    f32 = jnp.float32

    key = jax.random.PRNGKey(0)
    ks = jax.random.split(key, 16)
    x = jax.random.normal(ks[0], (B, Cin, H, W), f32)

    def bn_params(k, c):
        k1, k2, k3, k4 = jax.random.split(k, 4)
        return (1.0 + 0.1 * jax.random.normal(k1, (c,), f32),    # gamma
                0.1 * jax.random.normal(k2, (c,), f32),          # beta
                0.1 * jax.random.normal(k3, (c,), f32),          # running mean
                0.5 + jnp.abs(jax.random.normal(k4, (c,), f32))) # running var

    params = dict(
        conv1_w=0.2 * jax.random.normal(ks[1], (Cout, Cin, 1, 1), f32),
        conv1_b=0.05 * jax.random.normal(ks[11], (Cout,), f32),
        bn1=bn_params(ks[2], Cin),
        b1_w=0.2 * jax.random.normal(ks[3], (C4, Cin, 1, 1), f32),
        b1_b=0.05 * jax.random.normal(ks[12], (C4,), f32),
        bn2=bn_params(ks[4], C4),
        b2_w=0.1 * jax.random.normal(ks[5], (C4, C4, 3, 3), f32),
        b2_b=0.05 * jax.random.normal(ks[13], (C4,), f32),
        bn3=bn_params(ks[6], C4),
        b3_w=0.15 * jax.random.normal(ks[7], (Cout, C4, 1, 1), f32),
        b3_b=0.05 * jax.random.normal(ks[14], (Cout,), f32),
        fc1_w=0.1 * jax.random.normal(ks[8], (Cr, Cout, 1, 1), f32),
        fc2_w=0.1 * jax.random.normal(ks[9], (Cout, Cr, 1, 1), f32),
        sa_w=0.2 * jax.random.normal(ks[10], (1, 2, 7, 7), f32),
    )

    out = cbam_down_bottleneck(x, params, stride=stride)
    out = jax.block_until_ready(out)

    ref = _reference(x, params, stride=stride)
    assert out.shape == ref.shape == (B, Cout, H // stride, W // stride)
    err = float(jnp.max(jnp.abs(out - ref)))
    assert jnp.allclose(out, ref, atol=5e-3, rtol=5e-3), err

    print("KERNEL_OK")
</pallas_src>

<mosaic_0001>
module attributes {stable_mosaic.version = 11 : i64} {
  func.func @_block1_kernel(%arg0: i32, %arg1: i32, %arg2: memref<1x16x256xf32, #tpu.memory_space<vmem>>, %arg3: memref<16x16xf32, #tpu.memory_space<vmem>>, %arg4: memref<16x1xf32, #tpu.memory_space<vmem>>, %arg5: memref<16x1xf32, #tpu.memory_space<vmem>>, %arg6: memref<16x1xf32, #tpu.memory_space<vmem>>, %arg7: memref<16x1xf32, #tpu.memory_space<vmem>>, %arg8: memref<1x16x256xf32, #tpu.memory_space<vmem>>) attributes {dimension_semantics = [#tpu.dimension_semantics<parallel>, #tpu.dimension_semantics<parallel>], iteration_bounds = array<i64: 2, 1>, scalar_prefetch = 0 : i64, scratch_operands = 0 : i64, tpu.core_type = #tpu.core_type<tc>, window_params = [{transform_indices = @transform_0, window_bounds = array<i64: 1, 16, 256>}, {pipeline_mode = #tpu.pipeline_mode<synchronous>, transform_indices = @transform_1, window_bounds = array<i64: 16, 16>}, {pipeline_mode = #tpu.pipeline_mode<synchronous>, transform_indices = @transform_2, window_bounds = array<i64: 16, 1>}, {pipeline_mode = #tpu.pipeline_mode<synchronous>, transform_indices = @transform_3, window_bounds = array<i64: 16, 1>}, {pipeline_mode = #tpu.pipeline_mode<synchronous>, transform_indices = @transform_4, window_bounds = array<i64: 16, 1>}, {pipeline_mode = #tpu.pipeline_mode<synchronous>, transform_indices = @transform_5, window_bounds = array<i64: 16, 1>}, {transform_indices = @transform_6, window_bounds = array<i64: 1, 16, 256>}]} {
    %c0 = arith.constant 0 : index
    %c0_0 = arith.constant 0 : index
    %c0_1 = arith.constant 0 : index
    %0 = vector.load %arg2[%c0, %c0_0, %c0_1] : memref<1x16x256xf32, #tpu.memory_space<vmem>>, vector<1x16x256xf32>
    %1 = vector.shape_cast %0 : vector<1x16x256xf32> to vector<16x256xf32>
    %c0_2 = arith.constant 0 : index
    %c0_3 = arith.constant 0 : index
    %2 = vector.load %arg4[%c0_2, %c0_3] : memref<16x1xf32, #tpu.memory_space<vmem>>, vector<16x1xf32>
    %3 = vector.broadcast %2 : vector<16x1xf32> to vector<16x256xf32>
    %4 = arith.mulf %1, %3 : vector<16x256xf32>
    %c0_4 = arith.constant 0 : index
    %c0_5 = arith.constant 0 : index
    %5 = vector.load %arg5[%c0_4, %c0_5] : memref<16x1xf32, #tpu.memory_space<vmem>>, vector<16x1xf32>
    %6 = vector.broadcast %5 : vector<16x1xf32> to vector<16x256xf32>
    %7 = arith.addf %4, %6 : vector<16x256xf32>
    %cst = arith.constant 0.000000e+00 : f32
    %8 = vector.broadcast %cst : f32 to vector<16x256xf32>
    %9 = arith.maximumf %7, %8 : vector<16x256xf32>
    %c0_6 = arith.constant 0 : index
    %c0_7 = arith.constant 0 : index
    %10 = vector.load %arg3[%c0_6, %c0_7] : memref<16x16xf32, #tpu.memory_space<vmem>>, vector<16x16xf32>
    %cst_8 = arith.constant dense<0.000000e+00> : vector<16x256xf32>
    %11 = tpu.matmul %10, %9, %cst_8 {dimension_numbers = #tpu.dot_dimension_numbers<[1], [0], [0], [1], [0, 0, 1, 1], [], []>} : vector<16x16xf32>, vector<16x256xf32>, vector<16x256xf32> -> vector<16x256xf32>
    %c0_9 = arith.constant 0 : index
    %c0_10 = arith.constant 0 : index
    %12 = vector.load %arg6[%c0_9, %c0_10] : memref<16x1xf32, #tpu.memory_space<vmem>>, vector<16x1xf32>
    %13 = vector.broadcast %12 : vector<16x1xf32> to vector<16x256xf32>
    %14 = arith.mulf %11, %13 : vector<16x256xf32>
    %c0_11 = arith.constant 0 : index
    %c0_12 = arith.constant 0 : index
    %15 = vector.load %arg7[%c0_11, %c0_12] : memref<16x1xf32, #tpu.memory_space<vmem>>, vector<16x1xf32>
    %16 = vector.broadcast %15 : vector<16x1xf32> to vector<16x256xf32>
    %17 = arith.addf %14, %16 : vector<16x256xf32>
    %cst_13 = arith.constant 0.000000e+00 : f32
    %18 = vector.broadcast %cst_13 : f32 to vector<16x256xf32>
    %19 = arith.maximumf %17, %18 : vector<16x256xf32>
    %20 = vector.shape_cast %19 : vector<16x256xf32> to vector<1x16x256xf32>
    %c0_14 = arith.constant 0 : index
    %c0_15 = arith.constant 0 : index
    %c0_16 = arith.constant 0 : index
    %21 = vector.load %arg8[%c0_14, %c0_15, %c0_16] : memref<1x16x256xf32, #tpu.memory_space<vmem>>, vector<1x16x256xf32>
    tpu.vector_store %arg8[%c0_14, %c0_15, %c0_16], %20 {strides = array<i32>} : memref<1x16x256xf32, #tpu.memory_space<vmem>>, vector<1x16x256xf32>,
    return
  }
  func.func @transform_0(%arg0: i32, %arg1: i32) -> (i32, i32, i32) {
    %c0_i32 = arith.constant 0 : i32
    %c0_i32_0 = arith.constant 0 : i32
    return %arg0, %c0_i32, %arg1 : i32, i32, i32
  }
  func.func @transform_1(%arg0: i32, %arg1: i32) -> (i32, i32) {
    %c0_i32 = arith.constant 0 : i32
    %c0_i32_0 = arith.constant 0 : i32
    %c0_i32_1 = arith.constant 0 : i32
    return %c0_i32, %c0_i32_0 : i32, i32
  }
  func.func @transform_2(%arg0: i32, %arg1: i32) -> (i32, i32) {
    %c0_i32 = arith.constant 0 : i32
    %c0_i32_0 = arith.constant 0 : i32
    %c0_i32_1 = arith.constant 0 : i32
    return %c0_i32, %c0_i32_0 : i32, i32
  }
  func.func @transform_3(%arg0: i32, %arg1: i32) -> (i32, i32) {
    %c0_i32 = arith.constant 0 : i32
    %c0_i32_0 = arith.constant 0 : i32
    %c0_i32_1 = arith.constant 0 : i32
    return %c0_i32, %c0_i32_0 : i32, i32
  }
  func.func @transform_4(%arg0: i32, %arg1: i32) -> (i32, i32) {
    %c0_i32 = arith.constant 0 : i32
    %c0_i32_0 = arith.constant 0 : i32
    %c0_i32_1 = arith.constant 0 : i32
    return %c0_i32, %c0_i32_0 : i32, i32
  }
  func.func @transform_5(%arg0: i32, %arg1: i32) -> (i32, i32) {
    %c0_i32 = arith.constant 0 : i32
    %c0_i32_0 = arith.constant 0 : i32
    %c0_i32_1 = arith.constant 0 : i32
    return %c0_i32, %c0_i32_0 : i32, i32
  }
  func.func @transform_6(%arg0: i32, %arg1: i32) -> (i32, i32, i32) {
    %c0_i32 = arith.constant 0 : i32
    %c0_i32_0 = arith.constant 0 : i32
    return %arg0, %c0_i32, %arg1 : i32, i32, i32
  }
}

</mosaic_0001>

<llo_original>
// kernel: tpu_custom_call.1
$region0: #{tpu_custom_call.1}
  #allocation0 [shape = 'u32[]', space=smem, size = 0x4, offset = 0x4, fixed_abs, tag = 'smem constant byte address 0x4 - core index']
  #allocation1 [shape = 'u32[144,128]{1,0:T(1,128)}', space=vmem, size = 0x12000, scoped, tag = 'internal scratch']
  %s0 = inlined_call_operand.hbm [shape: f32[2,16,256], index: 0, kind: input, shape index: {}]
  %s1 = inlined_call_operand.hbm [shape: f32[16,16], index: 1, kind: input, shape index: {}]
  %s2 = inlined_call_operand.hbm [shape: f32[16,1], index: 2, kind: input, shape index: {}]
  %s3 = inlined_call_operand.hbm [shape: f32[16,1], index: 3, kind: input, shape index: {}]
  %s4 = inlined_call_operand.hbm [shape: f32[16,1], index: 4, kind: input, shape index: {}]
  %s5 = inlined_call_operand.hbm [shape: f32[16,1], index: 5, kind: input, shape index: {}]
  %s6 = inlined_call_operand.hbm [shape: f32[2,16,256], index: 6, kind: output, shape index: {}]
  %s7 = sld [smem:[#allocation0]]
  $region81: #{tpu_custom_call.1} parent=0
    _
  %s9 = ssub.s32 1, %s7
  %s10 = scalar_select 0, %s9, %s7
  $region1: #{tpu_custom_call.1} parent=0
    #allocation2 [shape = 'u8[32768]{0}', space=vmem, size = 0x8000, scoped, tag = 'input window, operand 0']
    #allocation3 [shape = 's32[2]{0}', space=sflag, size = 0x8, scoped, tag = 'scoped memory for tpu_custom_call.1']
    #allocation4 [shape = 's32[2]{0}', space=sflag, size = 0x8, scoped, tag = 'scoped memory for tpu_custom_call.1']
    #allocation5 [shape = 'u8[8192]{0}', space=vmem, size = 0x2000, scoped, tag = 'input window, operand 1, single buffered']
    #allocation6 [shape = 's32[1]{0}', space=sflag, size = 0x4, scoped, tag = 'scoped memory for tpu_custom_call.1']
    #allocation7 [shape = 'u8[8192]{0}', space=vmem, size = 0x2000, scoped, tag = 'input window, operand 2, single buffered']
    #allocation8 [shape = 'u8[8192]{0}', space=vmem, size = 0x2000, scoped, tag = 'input window, operand 3, single buffered']
    #allocation9 [shape = 's32[1]{0}', space=sflag, size = 0x4, scoped, tag = 'scoped memory for tpu_custom_call.1']
    #allocation10 [shape = 'u8[8192]{0}', space=vmem, size = 0x2000, scoped, tag = 'input window, operand 4, single buffered']
    #allocation11 [shape = 'u8[8192]{0}', space=vmem, size = 0x2000, scoped, tag = 'input window, operand 5, single buffered']
    #allocation12 [shape = 's32[1]{0}', space=sflag, size = 0x4, scoped, tag = 'scoped memory for tpu_custom_call.1']
    #allocation13 [shape = 'u8[32768]{0}', space=vmem, size = 0x8000, scoped, tag = 'output window, operand 0']
    %11 = vsyncpa [#allocation3], 0
    %s12 = scalar_lea.sflag [#allocation3], 1
    %13 = vsyncpa %s12, 0
    %14 = vsyncpa [#allocation6], 0
    %15 = vsyncpa [#allocation9], 0
    %16 = vsyncpa [#allocation12], 0
    %17 = vsyncpa [#allocation4], 0
    %s18 = scalar_lea.sflag [#allocation4], 1
    %19 = vsyncpa %s18, 0
    loop: start=0, step=1, limit=4
    $region2: #{tpu_custom_call.1} parent=1 // loop_pre_header
      _
    $region3: #{tpu_custom_call.1} parent=1 // loop_header
      %s21 = sphi 0, %s25
      %p22 = scmp.ge.s32.totalorder %s21, 4
      %s28 = sphi 0, %s40
      %s29 = sphi 0, %s36
      %s30 = sphi 0, %s28
      %s31 = sphi 0, %s29
      %s32 = sphi 0, %s30
      %s33 = sphi 0, %s31
      %s45 = sphi 0, %s47
      %s48 = sphi 0, %s45
      %s49 = sphi 0, %s48
      %s65 = sphi 0, %s49
      %s69 = sphi 0, %s69
      %s71 = sphi 0, %s69
      %s72 = sphi 0, %s71
      %s86 = sphi 0, %s72
      %s90 = sphi 0, %s90
      %s92 = sphi 0, %s90
      %s93 = sphi 0, %s92
      %s107 = sphi 0, %s93
      %s111 = sphi 0, %s111
      %s113 = sphi 0, %s111
      %s114 = sphi 0, %s113
      %s128 = sphi 0, %s114
      %s132 = sphi 0, %s132
      %s134 = sphi 0, %s132
      %s135 = sphi 0, %s134
      %s149 = sphi 0, %s135
      %s153 = sphi 0, %s153
      %s155 = sphi 0, %s153
      %s156 = sphi 0, %s155
      %s170 = sphi 0, %s156
      %s178 = sphi 0, %s180
      %s181 = sphi 0, %s178
      %s182 = sphi 0, %s181
      %s198 = sphi 0, %s182
    $region4: #{tpu_custom_call.1} parent=1 // loop_header_branch
      %24 = sbr.rel (%p22) target = $region8
    $region5: #{tpu_custom_call.1} parent=1 // loop_body
      %s26 = ssub.s32 %s21, 1
      %s27 = ssub.s32 %s21, 2
      %s34 = sadd.s32 1, %s29
      %p35 = scmp.ge.s32.totalorder %s34, 1
      %s36 = scalar_select %p35, 0, %s34
      %s37 = sadd.s32 1, %s28
      %s38 = scalar_select %p35, %s37, %s28
      %p39 = scmp.ge.s32.totalorder %s38, 2
      %s40 = scalar_select %p39, 0, %s38
      %s41 = ssub.s32 %s28, %s40
      %s42 = ssub.s32 %s29, %s36
      %s43 = sor.u32 %s41, %s42
      %p44 = scmp.eq.s32.totalorder %s43, 0
      %s46 = sadd.s32 %s45, 1
      %s47 = scalar_select %p44, %s45, %s46
      %p50 = pneg %p44
      %p51 = scmp.eq.s32.totalorder %s21, 1
      %p52 = por %p50, %p51
      %p53 = scmp.ne.s32.totalorder %s45, %s48
      %p54 = scmp.eq.s32.totalorder %s21, 0
      %p55 = por %p53, %p54
      %p56 = scmp.ne.s32.totalorder %s45, %s48
      %p57 = scmp.eq.s32.totalorder %s26, 1
      %p58 = por %p56, %p57
      %p59 = scmp.ne.s32.totalorder %s48, %s49
      %p60 = scmp.eq.s32.totalorder %s26, 0
      %p61 = por %p59, %p60
      %p62 = scmp.ne.s32.totalorder %s48, %s49
      %p63 = scmp.eq.s32.totalorder %s27, 1
      %p64 = por %p62, %p63
      %p66 = scmp.ne.s32.totalorder %s49, %s65
      %p67 = scmp.eq.s32.totalorder %s27, 0
      %p68 = por %p66, %p67
      %s70 = sadd.s32 %s69, 1
      %p73 = scmp.eq.s32.totalorder %s21, 1
      %p74 = scmp.ne.s32.totalorder %s69, %s71
      %p75 = scmp.eq.s32.totalorder %s21, 0
      %p76 = por %p74, %p75
      %p77 = scmp.ne.s32.totalorder %s69, %s71
      %p78 = scmp.eq.s32.totalorder %s26, 1
      %p79 = por %p77, %p78
      %p80 = scmp.ne.s32.totalorder %s71, %s72
      %p81 = scmp.eq.s32.totalorder %s26, 0
      %p82 = por %p80, %p81
      %p83 = scmp.ne.s32.totalorder %s71, %s72
      %p84 = scmp.eq.s32.totalorder %s27, 1
      %p85 = por %p83, %p84
      %p87 = scmp.ne.s32.totalorder %s72, %s86
      %p88 = scmp.eq.s32.totalorder %s27, 0
      %p89 = por %p87, %p88
      %s91 = sadd.s32 %s90, 1
      %p94 = scmp.eq.s32.totalorder %s21, 1
      %p95 = scmp.ne.s32.totalorder %s90, %s92
      %p96 = scmp.eq.s32.totalorder %s21, 0
      %p97 = por %p95, %p96
      %p98 = scmp.ne.s32.totalorder %s90, %s92
      %p99 = scmp.eq.s32.totalorder %s26, 1
      %p100 = por %p98, %p99
      %p101 = scmp.ne.s32.totalorder %s92, %s93
      %p102 = scmp.eq.s32.totalorder %s26, 0
      %p103 = por %p101, %p102
      %p104 = scmp.ne.s32.totalorder %s92, %s93
      %p105 = scmp.eq.s32.totalorder %s27, 1
      %p106 = por %p104, %p105
      %p108 = scmp.ne.s32.totalorder %s93, %s107
      %p109 = scmp.eq.s32.totalorder %s27, 0
      %p110 = por %p108, %p109
      %s112 = sadd.s32 %s111, 1
      %p115 = scmp.eq.s32.totalorder %s21, 1
      %p116 = scmp.ne.s32.totalorder %s111, %s113
      %p117 = scmp.eq.s32.totalorder %s21, 0
      %p118 = por %p116, %p117
      %p119 = scmp.ne.s32.totalorder %s111, %s113
      %p120 = scmp.eq.s32.totalorder %s26, 1
      %p121 = por %p119, %p120
      %p122 = scmp.ne.s32.totalorder %s113, %s114
      %p123 = scmp.eq.s32.totalorder %s26, 0
      %p124 = por %p122, %p123
      %p125 = scmp.ne.s32.totalorder %s113, %s114
      %p126 = scmp.eq.s32.totalorder %s27, 1
      %p127 = por %p125, %p126
      %p129 = scmp.ne.s32.totalorder %s114, %s128
      %p130 = scmp.eq.s32.totalorder %s27, 0
      %p131 = por %p129, %p130
      %s133 = sadd.s32 %s132, 1
      %p136 = scmp.eq.s32.totalorder %s21, 1
      %p137 = scmp.ne.s32.totalorder %s132, %s134
      %p138 = scmp.eq.s32.totalorder %s21, 0
      %p139 = por %p137, %p138
      %p140 = scmp.ne.s32.totalorder %s132, %s134
      %p141 = scmp.eq.s32.totalorder %s26, 1
      %p142 = por %p140, %p141
      %p143 = scmp.ne.s32.totalorder %s134, %s135
      %p144 = scmp.eq.s32.totalorder %s26, 0
      %p145 = por %p143, %p144
      %p146 = scmp.ne.s32.totalorder %s134, %s135
      %p147 = scmp.eq.s32.totalorder %s27, 1
      %p148 = por %p146, %p147
      %p150 = scmp.ne.s32.totalorder %s135, %s149
      %p151 = scmp.eq.s32.totalorder %s27, 0
      %p152 = por %p150, %p151
      %s154 = sadd.s32 %s153, 1
      %p157 = scmp.eq.s32.totalorder %s21, 1
      %p158 = scmp.ne.s32.totalorder %s153, %s155
      %p159 = scmp.eq.s32.totalorder %s21, 0
      %p160 = por %p158, %p159
      %p161 = scmp.ne.s32.totalorder %s153, %s155
      %p162 = scmp.eq.s32.totalorder %s26, 1
      %p163 = por %p161, %p162
      %p164 = scmp.ne.s32.totalorder %s155, %s156
      %p165 = scmp.eq.s32.totalorder %s26, 0
      %p166 = por %p164, %p165
      %p167 = scmp.ne.s32.totalorder %s155, %s156
      %p168 = scmp.eq.s32.totalorder %s27, 1
      %p169 = por %p167, %p168
      %p171 = scmp.ne.s32.totalorder %s156, %s170
      %p172 = scmp.eq.s32.totalorder %s27, 0
      %p173 = por %p171, %p172
      %s174 = ssub.s32 %s28, %s40
      %s175 = ssub.s32 %s29, %s36
      %s176 = sor.u32 %s174, %s175
      %p177 = scmp.eq.s32.totalorder %s176, 0
      %s179 = sadd.s32 %s178, 1
      %s180 = scalar_select %p177, %s178, %s179
      %p183 = pneg %p177
      %p184 = scmp.eq.s32.totalorder %s21, 1
      %p185 = por %p183, %p184
      %p186 = scmp.ne.s32.totalorder %s178, %s181
      %p187 = scmp.eq.s32.totalorder %s21, 0
      %p188 = por %p186, %p187
      %p189 = scmp.ne.s32.totalorder %s178, %s181
      %p190 = scmp.eq.s32.totalorder %s26, 1
      %p191 = por %p189, %p190
      %p192 = scmp.ne.s32.totalorder %s181, %s182
      %p193 = scmp.eq.s32.totalorder %s26, 0
      %p194 = por %p192, %p193
      %p195 = scmp.ne.s32.totalorder %s181, %s182
      %p196 = scmp.eq.s32.totalorder %s27, 1
      %p197 = por %p195, %p196
      %p199 = scmp.ne.s32.totalorder %s182, %s198
      %p200 = scmp.eq.s32.totalorder %s27, 0
      %p201 = por %p199, %p200
      %p202 = scmp.le.s32.totalorder 1, %s21
      %p203 = scmp.lt.s32.totalorder %s21, 3
      %p204 = pnand %p202, %p203
      %p205 = pneg %p204
      // Predicated region
      $region9: #{tpu_custom_call.1} parent=5 // pred_check
        _
      $region10: #{tpu_custom_call.1} parent=5 // pred_check_branch
        %207 = sbr.rel (%p204) target = $region12
      $region11: #{tpu_custom_call.1} parent=5 // pred_region
        %s208 = ssub.s32 %s21, 1
        // Predicated region
        $region13: #{tpu_custom_call.1} parent=11 // pred_check
          %p209 = pneg %p82
        $region14: #{tpu_custom_call.1} parent=11 // pred_check_branch
          %211 = sbr.rel (%p209) target = $region16
        $region15: #{tpu_custom_call.1} parent=11 // pred_region
          %s213 = ssub.s32 256, 256
          %214 = vsyncadd [#allocation6], %s213
          %s215 = sshll.u32 [#allocation5], 4
          %s216 = int_to_ptr.vmem [resolvable:$true] %s215
          %221 = dma.hbm_to_vmem [thread:$0]  %s1, 256, %s216, [#allocation6], 128, 128, 8
        $region16: #{tpu_custom_call.1} parent=11 // pred_fallthru
          _
        // Predicated region
        $region17: #{tpu_custom_call.1} parent=11 // pred_check
          %p222 = pneg %p103
        $region18: #{tpu_custom_call.1} parent=11 // pred_check_branch
          %224 = sbr.rel (%p222) target = $region20
        $region19: #{tpu_custom_call.1} parent=11 // pred_region
          %s226 = ssub.s32 256, 256
          %227 = vsyncadd [#allocation6], %s226
          %s228 = sshll.u32 [#allocation7], 4
          %s229 = int_to_ptr.vmem [resolvable:$true] %s228
          %234 = dma.hbm_to_vmem [thread:$0]  %s2, 256, %s229, [#allocation6], 128, 128, 8
        $region20: #{tpu_custom_call.1} parent=11 // pred_fallthru
          _
        // Predicated region
        $region21: #{tpu_custom_call.1} parent=11 // pred_check
          %p235 = pneg %p124
        $region22: #{tpu_custom_call.1} parent=11 // pred_check_branch
          %237 = sbr.rel (%p235) target = $region24
        $region23: #{tpu_custom_call.1} parent=11 // pred_region
          %s239 = ssub.s32 256, 256
          %240 = vsyncadd [#allocation9], %s239
          %s241 = sshll.u32 [#allocation8], 4
          %s242 = int_to_ptr.vmem [resolvable:$true] %s241
          %247 = dma.hbm_to_vmem [thread:$0]  %s3, 256, %s242, [#allocation9], 128, 128, 8
        $region24: #{tpu_custom_call.1} parent=11 // pred_fallthru
          _
        // Predicated region
        $region25: #{tpu_custom_call.1} parent=11 // pred_check
          %p248 = pneg %p145
        $region26: #{tpu_custom_call.1} parent=11 // pred_check_branch
          %250 = sbr.rel (%p248) target = $region28
        $region27: #{tpu_custom_call.1} parent=11 // pred_region
          %s252 = ssub.s32 256, 256
          %253 = vsyncadd [#allocation9], %s252
          %s254 = sshll.u32 [#allocation10], 4
          %s255 = int_to_ptr.vmem [resolvable:$true] %s254
          %260 = dma.hbm_to_vmem [thread:$0]  %s4, 256, %s255, [#allocation9], 128, 128, 8
        $region28: #{tpu_custom_call.1} parent=11 // pred_fallthru
          _
        // Predicated region
        $region29: #{tpu_custom_call.1} parent=11 // pred_check
          %p261 = pneg %p166
        $region30: #{tpu_custom_call.1} parent=11 // pred_check_branch
          %263 = sbr.rel (%p261) target = $region32
        $region31: #{tpu_custom_call.1} parent=11 // pred_region
          %s265 = ssub.s32 256, 256
          %266 = vsyncadd [#allocation12], %s265
          %s267 = sshll.u32 [#allocation11], 4
          %s268 = int_to_ptr.vmem [resolvable:$true] %s267
          %273 = dma.hbm_to_vmem [thread:$0]  %s5, 256, %s268, [#allocation12], 128, 128, 8
        $region32: #{tpu_custom_call.1} parent=11 // pred_fallthru
          _
      $region12: #{tpu_custom_call.1} parent=5 // pred_fallthru
        _
      %p274 = scmp.lt.s32.totalorder %s21, 2
      // Predicated region
      $region33: #{tpu_custom_call.1} parent=5 // pred_check
        %p275 = pneg %p274
      $region34: #{tpu_custom_call.1} parent=5 // pred_check_branch
        %277 = sbr.rel (%p275) target = $region36
      $region35: #{tpu_custom_call.1} parent=5 // pred_region
        // Predicated region
        $region37: #{tpu_custom_call.1} parent=35 // pred_check
          %p278 = pneg %p55
        $region38: #{tpu_custom_call.1} parent=35 // pred_check_branch
          %280 = sbr.rel (%p278) target = $region40
        $region39: #{tpu_custom_call.1} parent=35 // pred_region
          %s281 = sand.u32 %s45, 1
          %s282 = scalar_lea.sflag [#allocation3], %s281
          %s283 = sand.u32 %s45, 1
          %s284 = smul.addr %s283, 32
          %s285 = scalar_lea.vmem [#allocation2], %s284
          %s286 = smul.u32 2, %s29
          %s288 = ssub.s32 512, 512
          %289 = vsyncadd %s282, %s288
          %s290 = smul.addr %s28, 4
          %s291 = sadd.s32 %s286, %s290
          %s292 = smul.addr %s291, 128
          %s293 = scalar_lea.hbm %s0, %s292
          %s294 = sshll.u32 %s285, 4
          %s295 = int_to_ptr.vmem [resolvable:$true] %s294
          %300 = dma.hbm_to_vmem [thread:$0]  %s293, 512, %s295, %s282, 256, 256, 16
        $region40: #{tpu_custom_call.1} parent=35 // pred_fallthru
          _
      $region36: #{tpu_custom_call.1} parent=5 // pred_fallthru
        _
      %p301 = scmp.le.s32.totalorder 1, %s21
      %p302 = scmp.lt.s32.totalorder %s21, 3
      %p303 = pnand %p301, %p302
      %p304 = pneg %p303
      // Predicated region
      $region41: #{tpu_custom_call.1} parent=5 // pred_check
        _
      $region42: #{tpu_custom_call.1} parent=5 // pred_check_branch
        %306 = sbr.rel (%p303) target = $region44
      $region43: #{tpu_custom_call.1} parent=5 // pred_region
        %s307 = ssub.s32 %s21, 1
        %s308 = sand.u32 %s48, 1
        %s309 = scalar_lea.sflag [#allocation3], %s308
        %s310 = sand.u32 %s48, 1
        %s311 = smul.addr %s310, 32
        %s312 = scalar_lea.vmem [#allocation2], %s311
        // Predicated region
        $region45: #{tpu_custom_call.1} parent=43 // pred_check
          %p313 = pneg %p61
        $region46: #{tpu_custom_call.1} parent=43 // pred_check_branch
          %315 = sbr.rel (%p313) target = $region48
        $region47: #{tpu_custom_call.1} parent=43 // pred_region
          %316 = dma.done %s309, 512
        $region48: #{tpu_custom_call.1} parent=43 // pred_fallthru
          _
        // Predicated region
        $region49: #{tpu_custom_call.1} parent=43 // pred_check
          %p317 = pneg %p82
        $region50: #{tpu_custom_call.1} parent=43 // pred_check_branch
          %319 = sbr.rel (%p317) target = $region52
        $region51: #{tpu_custom_call.1} parent=43 // pred_region
          %320 = dma.done [#allocation6], 256
        $region52: #{tpu_custom_call.1} parent=43 // pred_fallthru
          _
        // Predicated region
        $region53: #{tpu_custom_call.1} parent=43 // pred_check
          %p321 = pneg %p103
        $region54: #{tpu_custom_call.1} parent=43 // pred_check_branch
          %323 = sbr.rel (%p321) target = $region56
        $region55: #{tpu_custom_call.1} parent=43 // pred_region
          %324 = dma.done [#allocation6], 256
        $region56: #{tpu_custom_call.1} parent=43 // pred_fallthru
          _
        // Predicated region
        $region57: #{tpu_custom_call.1} parent=43 // pred_check
          %p325 = pneg %p124
        $region58: #{tpu_custom_call.1} parent=43 // pred_check_branch
          %327 = sbr.rel (%p325) target = $region60
        $region59: #{tpu_custom_call.1} parent=43 // pred_region
          %328 = dma.done [#allocation9], 256
        $region60: #{tpu_custom_call.1} parent=43 // pred_fallthru
          _
        // Predicated region
        $region61: #{tpu_custom_call.1} parent=43 // pred_check
          %p329 = pneg %p145
        $region62: #{tpu_custom_call.1} parent=43 // pred_check_branch
          %331 = sbr.rel (%p329) target = $region64
        $region63: #{tpu_custom_call.1} parent=43 // pred_region
          %332 = dma.done [#allocation9], 256
        $region64: #{tpu_custom_call.1} parent=43 // pred_fallthru
          _
        // Predicated region
        $region65: #{tpu_custom_call.1} parent=43 // pred_check
          %p333 = pneg %p166
        $region66: #{tpu_custom_call.1} parent=43 // pred_check_branch
          %335 = sbr.rel (%p333) target = $region68
        $region67: #{tpu_custom_call.1} parent=43 // pred_region
          %336 = dma.done [#allocation12], 256
        $region68: #{tpu_custom_call.1} parent=43 // pred_fallthru
          _
        %s337 = sand.u32 %s48, 1
        %s338 = scalar_lea.sflag [#allocation3], %s337
        %s339 = sand.u32 %s48, 1
        %s340 = smul.addr %s339, 32
        %s341 = scalar_lea.vmem [#allocation2], %s340
        %p342 = pneg %p61
        %p343 = pneg %p58
        %p344 = pneg %p82
        %p345 = pneg %p79
        %p346 = pneg %p103
        %p347 = pneg %p100
        %p348 = pneg %p124
        %p349 = pneg %p121
        %p350 = pneg %p145
        %p351 = pneg %p142
        %p352 = pneg %p166
        %p353 = pneg %p163
        %p354 = pneg %p194
        %p355 = pneg %p191
        %s356 = sand.u32 %s181, 1
        %s357 = scalar_lea.sflag [#allocation4], %s356
        %s358 = sand.u32 %s181, 1
        %s359 = smul.addr %s358, 32
        %s360 = scalar_lea.vmem [#allocation13], %s359
        %s361 = smul.u32 2, %s31
        %s362 = smul.u32 2, %s31
        %v363 = vld [vmem:[%s312] sm:$0xff]
        %v364 = vld [vmem:[%s312 + $0x8] sm:$0xff]
        %v365 = vld [vmem:[%s312 + $0x10] sm:$0xff]
        %v366 = vld [vmem:[%s312 + $0x18] sm:$0xff]
        %v367 = vld [vmem:[#allocation7] sm:$0xff]
        %v368 = vld [vmem:[#allocation7 + $0x8] sm:$0xff]
        %370 = vset.pattern.permute.xlu0 0
        %371 = vperm.xlu0 %370, %v367
        %v372 = vpop.permute.xlu0 %371
        %375 = vset.pattern.permute.xlu0 0
        %376 = vperm.xlu0 %375, %v368
        %v377 = vpop.permute.xlu0 %376
        %v379 = vmul.f32 %v363, %v372
        %v380 = vmul.f32 %v364, %v372
        %v381 = vmul.f32 %v365, %v377
        %v382 = vmul.f32 %v366, %v377
        %v383 = vld [vmem:[#allocation8] sm:$0xff]
        %v384 = vld [vmem:[#allocation8 + $0x8] sm:$0xff]
        %386 = vset.pattern.permute.xlu0 0
        %387 = vperm.xlu0 %386, %v383
        %v388 = vpop.permute.xlu0 %387
        %391 = vset.pattern.permute.xlu0 0
        %392 = vperm.xlu0 %391, %v384
        %v393 = vpop.permute.xlu0 %392
        %v395 = vadd.f32 %v379, %v388
        %v396 = vadd.f32 %v380, %v388
        %v397 = vadd.f32 %v381, %v393
        %v398 = vadd.f32 %v382, %v393
        %v399 = vmax.f32 %v395, 0.0
        %v400 = vmax.f32 %v396, 0.0
        %v401 = vmax.f32 %v397, 0.0
        %v402 = vmax.f32 %v398, 0.0
        %v403 = vld [vmem:[#allocation5] sm:$0xff]
        %v404 = vld [vmem:[#allocation5 + $0x8] sm:$0xff]
        %vm405 = vcmask 130048
        %v407 = vsel %vm405, %v403, 0
        %v410 = vsel %vm405, %v404, 0
        %412 = vmatprep.subr.mxu0 %v400
        %413 = vmatpush1.msra.mxu0 %v399
        %414 = vmatprep.subr.mxu0 %v402
        %415 = vmatpush1.msra.mxu0 %v401
        %416 = vmatprep.subr.mxu0 0.0
        %417 = vmatpush1.msra.mxu0 0.0
        %418 = vmatprep.subr.mxu0 0.0
        %419 = vmatpush1.msra.mxu0 0.0
        %420 = vmatprep.subr.mxu0 0.0
        %421 = vmatpush1.msra.mxu0 0.0
        %422 = vmatprep.subr.mxu0 0.0
        %423 = vmatpush1.msra.mxu0 0.0
        %424 = vmatprep.subr.mxu0 0.0
        %425 = vmatpush1.msra.mxu0 0.0
        %426 = vmatprep.subr.mxu0 0.0
        %427 = vmatpush1.msra.mxu0 0.0
        %428 = vmatprep.subr.mxu0 0.0
        %429 = vmatpush1.msra.mxu0 0.0
        %430 = vmatprep.subr.mxu0 0.0
        %431 = vmatpush1.msra.mxu0 0.0
        %432 = vmatprep.subr.mxu0 0.0
        %433 = vmatpush1.msra.mxu0 0.0
        %434 = vmatprep.subr.mxu0 0.0
        %435 = vmatpush1.msra.mxu0 0.0
        %436 = vmatprep.subr.mxu0 0.0
        %437 = vmatpush1.msra.mxu0 0.0
        %438 = vmatprep.subr.mxu0 0.0
        %439 = vmatpush1.msra.mxu0 0.0
        %440 = vmatprep.subr.mxu0 0.0
        %441 = vmatpush1.msra.mxu0 0.0
        %442 = vmatprep.subr.mxu0 0.0
        %443 = vmatpush1.msra.mxu0 0.0
        %444 = vmatprep.subr.mxu0 0.0
        %445 = vmatpush1.msra.mxu0 0.0
        %446 = vmatprep.subr.mxu0 0.0
        %447 = vmatpush1.msra.mxu0 0.0
        %448 = vmatprep.subr.mxu0 0.0
        %449 = vmatpush1.msra.mxu0 0.0
        %450 = vmatprep.subr.mxu0 0.0
        %451 = vmatpush1.msra.mxu0 0.0
        %452 = vmatprep.subr.mxu0 0.0
        %453 = vmatpush1.msra.mxu0 0.0
        %454 = vmatprep.subr.mxu0 0.0
        %455 = vmatpush1.msra.mxu0 0.0
        %456 = vmatprep.subr.mxu0 0.0
        %457 = vmatpush1.msra.mxu0 0.0
        %458 = vmatprep.subr.mxu0 0.0
        %459 = vmatpush1.msra.mxu0 0.0
        %460 = vmatprep.subr.mxu0 0.0
        %461 = vmatpush1.msra.mxu0 0.0
        %462 = vmatprep.subr.mxu0 0.0
        %463 = vmatpush1.msra.mxu0 0.0
        %464 = vmatprep.subr.mxu0 0.0
        %465 = vmatpush1.msra.mxu0 0.0
        %466 = vmatprep.subr.mxu0 0.0
        %467 = vmatpush1.msra.mxu0 0.0
        %468 = vmatprep.subr.mxu0 0.0
        %469 = vmatpush1.msra.mxu0 0.0
        %470 = vmatprep.subr.mxu0 0.0
        %471 = vmatpush1.msra.mxu0 0.0
        %472 = vmatprep.subr.mxu0 0.0
        %473 = vmatpush1.msra.mxu0 0.0
        %474 = vmatprep.subr.mxu0 0.0
        %475 = vmatpush1.msra.mxu0 0.0
        %476 = vmatprep.mubr.f32.mxu0 0.0
        %477 = vmatmul.mubr.f32.gmra.mrb[0].mxu0 %v407
        %v478 = vpop.f32.mrb[0].mxu0
        %v479 = vadd.f32 0.0, %v478
        %v480 = vpop.f32.mrb[0].mxu0
        %v481 = vadd.f32 0.0, %v480
        %482 = vmatprep.mubr.f32.mxu0 0.0
        %483 = vmatmul.mubr.f32.gmra.mrb[0].mxu0 %v410
        %v484 = vpop.f32.mrb[0].mxu0
        %v485 = vadd.f32 0.0, %v484
        %v486 = vpop.f32.mrb[0].mxu0
        %v487 = vadd.f32 0.0, %v486
        %488 = vdwg.mxu0
        %v489 = vld [vmem:[#allocation10] sm:$0xff]
        %v490 = vld [vmem:[#allocation10 + $0x8] sm:$0xff]
        %492 = vset.pattern.permute.xlu0 0
        %493 = vperm.xlu0 %492, %v489
        %v494 = vpop.permute.xlu0 %493
        %497 = vset.pattern.permute.xlu0 0
        %498 = vperm.xlu0 %497, %v490
        %v499 = vpop.permute.xlu0 %498
        %v501 = vmul.f32 %v479, %v494
        %v502 = vmul.f32 %v481, %v494
        %v503 = vmul.f32 %v485, %v499
        %v504 = vmul.f32 %v487, %v499
        %v505 = vld [vmem:[#allocation11] sm:$0xff]
        %v506 = vld [vmem:[#allocation11 + $0x8] sm:$0xff]
        %508 = vset.pattern.permute.xlu0 0
        %509 = vperm.xlu0 %508, %v505
        %v510 = vpop.permute.xlu0 %509
        %513 = vset.pattern.permute.xlu0 0
        %514 = vperm.xlu0 %513, %v506
        %v515 = vpop.permute.xlu0 %514
        %v517 = vadd.f32 %v501, %v510
        %v518 = vadd.f32 %v502, %v510
        %v519 = vadd.f32 %v503, %v515
        %v520 = vadd.f32 %v504, %v515
        %v521 = vmax.f32 %v517, 0.0
        %v522 = vmax.f32 %v518, 0.0
        %v523 = vmax.f32 %v519, 0.0
        %v524 = vmax.f32 %v520, 0.0
        %525 = vst [vmem:[%s360] sm:$0xff] %v521
        %526 = vst [vmem:[%s360 + $0x8] sm:$0xff] %v522
        %527 = vst [vmem:[%s360 + $0x10] sm:$0xff] %v523
        %528 = vst [vmem:[%s360 + $0x18] sm:$0xff] %v524
        %s529 = sand.u32 %s181, 1
        %s530 = scalar_lea.sflag [#allocation4], %s529
        %s531 = sand.u32 %s181, 1
        %s532 = smul.addr %s531, 32
        %s533 = scalar_lea.vmem [#allocation13], %s532
        // Predicated region
        $region69: #{tpu_custom_call.1} parent=43 // pred_check
          %p534 = pneg %p191
        $region70: #{tpu_custom_call.1} parent=43 // pred_check_branch
          %536 = sbr.rel (%p534) target = $region72
        $region71: #{tpu_custom_call.1} parent=43 // pred_region
          %s537 = smul.u32 2, %s31
          %s539 = ssub.s32 512, 512
          %540 = vsyncadd %s530, %s539
          %s541 = smul.addr %s30, 4
          %s542 = sadd.s32 %s537, %s541
          %s543 = smul.addr %s542, 128
          %s544 = scalar_lea.hbm %s6, %s543
          %s545 = sshll.u32 %s533, 4
          %s546 = int_to_ptr.vmem [resolvable:$true] %s545
          %551 = dma.vmem_to_hbm [thread:$0]  %s546, 512, %s544, %s530, 256, 256, 16
        $region72: #{tpu_custom_call.1} parent=43 // pred_fallthru
          _
      $region44: #{tpu_custom_call.1} parent=5 // pred_fallthru
        _
      %p552 = scmp.le.s32.totalorder 2, %s21
      // Predicated region
      $region73: #{tpu_custom_call.1} parent=5 // pred_check
        %p553 = pneg %p552
      $region74: #{tpu_custom_call.1} parent=5 // pred_check_branch
        %555 = sbr.rel (%p553) target = $region76
      $region75: #{tpu_custom_call.1} parent=5 // pred_region
        %s556 = ssub.s32 %s21, 2
        // Predicated region
        $region77: #{tpu_custom_call.1} parent=75 // pred_check
          %p557 = pneg %p197
        $region78: #{tpu_custom_call.1} parent=75 // pred_check_branch
          %559 = sbr.rel (%p557) target = $region80
        $region79: #{tpu_custom_call.1} parent=75 // pred_region
          %s560 = sand.u32 %s182, 1
          %s561 = scalar_lea.sflag [#allocation4], %s560
          %s562 = sand.u32 %s182, 1
          %s563 = smul.addr %s562, 32
          %s564 = scalar_lea.vmem [#allocation13], %s563
          %565 = dma.done %s561, 512
        $region80: #{tpu_custom_call.1} parent=75 // pred_fallthru
          _
      $region76: #{tpu_custom_call.1} parent=5 // pred_fallthru
        _
    $region6: #{tpu_custom_call.1} parent=1 // loop_footer
      %s25 = sadd.s32 1, %s21
    $region7: #{tpu_custom_call.1} parent=1 // loop_footer_branch
      %20 = sbr.rel target = $region3
    $region8: #{tpu_custom_call.1} parent=1 // loop_exit
      _
    %566 = vsyncpa [#allocation3], 1
    %s567 = scalar_lea.sflag [#allocation3], 1
    %568 = vsyncpa %s567, 1
    %569 = vsyncpa [#allocation6], 1
    %570 = vsyncpa [#allocation9], 1
    %571 = vsyncpa [#allocation12], 1
    %572 = vsyncpa [#allocation4], 1
    %s573 = scalar_lea.sflag [#allocation4], 1
    %574 = vsyncpa %s573, 1

</llo_original>
